<compile_context>
chip_gen: v6e
topology: v6e:2x2x1
jax: 0.10.0
libtpu: 0.0.40
codegen_flags: <defaults>
</compile_context>

<pallas_src>
import functools

import jax
import jax.numpy as jnp
import numpy as np
from jax.experimental import pallas as pl
from jax.experimental.pallas import tpu as pltpu

LANE = 128      # vreg lane width  (last dim)
SUBLANE = 8     # vreg sublane width (second-to-last dim)


def _round_up(x, m):
    return ((x + m - 1) // m) * m


def _choose_tm(batch_p, block_batch):
    """Pick a batch tile: multiple of 8, divides batch_p, <= block_batch,
    and (when possible) yields >= 2 grid steps so both v7x TensorCores work."""
    cap = max(SUBLANE, (block_batch // SUBLANE) * SUBLANE)  # sublane-align cap
    cap = min(cap, batch_p)
    if batch_p >= 2 * SUBLANE:
        cap = min(cap, max(SUBLANE, ((batch_p // 2) // SUBLANE) * SUBLANE))
    tm = cap
    while batch_p % tm != 0:   # largest multiple of 8 <= cap dividing batch_p
        tm -= SUBLANE
    return tm


def mlp_kernel(x_ref, w1_ref, b1_ref, w2_ref, b2_ref, w3_ref, b3_ref, o_ref):
    # fc1 (+ eval-mode dropout == identity) + relu.
    # bf16 cast happens here, in VMEM; MXU accumulates in f32.
    x = x_ref[...].astype(jnp.bfloat16)
    h = jnp.dot(x, w1_ref[...], preferred_element_type=jnp.float32)
    h = jnp.maximum(h + b1_ref[...], 0.0)
    # fc2 (+ dropout identity) + relu
    h = jnp.dot(h.astype(jnp.bfloat16), w2_ref[...],
                preferred_element_type=jnp.float32)
    h = jnp.maximum(h + b2_ref[...], 0.0)
    # predict (unpadded N = out_f; bias add in f32, store f32)
    out = jnp.dot(h.astype(jnp.bfloat16), w3_ref[...],
                  preferred_element_type=jnp.float32)
    o_ref[...] = (out + b3_ref[...]).astype(o_ref.dtype)


def prepare_params(w1, b1, w2, b2, w3, b3):
    """Pad the hidden dim to 128 lanes and cast weights to bf16, ONCE.

    Input x's feature dim and the output dim are left at their true widths
    (they only appear as the K dim of fc1 / N dim of predict respectively).
    Zero padding of hidden rows/cols is exact: ReLU(0 + 0) = 0 and zero rows
    of w2/w3 contribute nothing downstream.
    """
    in_f, hid = w1.shape
    out_f = w3.shape[1]
    hid_p = _round_up(hid, LANE)

    def pad2(a, rows, cols, dtype):
        r, c = a.shape
        return jnp.pad(a, ((0, rows - r), (0, cols - c))).astype(dtype)

    w1b = pad2(w1, in_f, hid_p, jnp.bfloat16)
    w2b = pad2(w2, hid_p, hid_p, jnp.bfloat16)
    w3b = pad2(w3, hid_p, out_f, jnp.bfloat16)
    b1f = pad2(b1, 1, hid_p, jnp.float32)
    b2f = pad2(b2, 1, hid_p, jnp.float32)
    b3f = pad2(b3, 1, out_f, jnp.float32)
    return w1b, b1f, w2b, b2f, w3b, b3f


@functools.partial(jax.jit, static_argnames=("block_batch",))
def mlp_forward(x, w1b, b1f, w2b, b2f, w3b, b3f, *, block_batch=1024):
    batch, in_f = x.shape
    hid_p = w1b.shape[1]
    out_f = w3b.shape[1]

    # Pad batch only to a sublane multiple; slice back only if padded.
    batch_p = _round_up(batch, SUBLANE)
    tm = _choose_tm(batch_p, block_batch)
    grid = (batch_p // tm,)

    xp = x if batch_p == batch else jnp.pad(x, ((0, batch_p - batch), (0, 0)))

    flops = 2 * batch_p * (in_f * hid_p + hid_p * hid_p + hid_p * out_f)
    bytes_accessed = (batch_p * in_f * 4                    # x (f32, unpadded)
                      + (w1b.size + w2b.size + w3b.size) * 2
                      + (b1f.size + b2f.size + b3f.size) * 4
                      + batch_p * out_f * 4)                # output (f32, unpadded)

    # Weights / biases: whole-array blocks, constant index_map -> VMEM-resident
    # across all batch-grid steps (never re-DMA'd).
    whole = lambda a: pl.BlockSpec(a.shape, lambda i: (0, 0))

    out = pl.pallas_call(
        mlp_kernel,
        out_shape=jax.ShapeDtypeStruct((batch_p, out_f), jnp.float32),
        grid=grid,
        in_specs=[
            pl.BlockSpec((tm, in_f), lambda i: (i, 0)),   # activations: tiled,
            whole(w1b), whole(b1f),                       # unpadded last dim
            whole(w2b), whole(b2f),
            whole(w3b), whole(b3f),
        ],
        out_specs=pl.BlockSpec((tm, out_f), lambda i: (i, 0)),
        compiler_params=pltpu.CompilerParams(
            dimension_semantics=("parallel",)),
        cost_estimate=pl.CostEstimate(
            flops=flops, bytes_accessed=bytes_accessed, transcendentals=0),
    )(xp, w1b, b1f, w2b, b2f, w3b, b3f)

    return out if batch_p == batch else out[:batch]


def init_params(key, input_size, hidden_size, output_size):
    """Deterministic init mirroring the PyTorch module's shapes.

    Weights: kaiming-normal-like (std = sqrt(2 / fan_in)).
    Biases: PyTorch Linear default, U(-1/sqrt(fan_in), 1/sqrt(fan_in)).
    Stored as [in, out] so the kernel computes x @ W.
    """
    ks = jax.random.split(key, 6)

    def kaiming(k, fan_in, fan_out):
        std = np.sqrt(2.0 / fan_in)
        return jax.random.normal(k, (fan_in, fan_out), jnp.float32) * std

    def bias(k, fan_in, fan_out):
        bound = 1.0 / np.sqrt(fan_in)
        return jax.random.uniform(k, (1, fan_out), jnp.float32, -bound, bound)

    w1 = kaiming(ks[0], input_size, hidden_size)
    b1 = bias(ks[1], input_size, hidden_size)
    w2 = kaiming(ks[2], hidden_size, hidden_size)
    b2 = bias(ks[3], hidden_size, hidden_size)
    w3 = kaiming(ks[4], hidden_size, output_size)
    b3 = bias(ks[5], hidden_size, output_size)
    return w1, b1, w2, b2, w3, b3


def mlp_reference(x, w1, b1, w2, b2, w3, b3):
    h = jnp.maximum(x @ w1 + b1, 0.0)
    h = jnp.maximum(h @ w2 + b2, 0.0)
    return h @ w3 + b3


if __name__ == "__main__":
    input_size, hidden_size, output_size = 32, 32, 4
    dropout = 0.1  # eval-mode: identity

    key = jax.random.PRNGKey(0)
    kx1, kx2, kx3, kp = jax.random.split(key, 4)
    params = init_params(kp, input_size, hidden_size, output_size)
    prepped = prepare_params(*params)   # pad + bf16 cast exactly once

    # bf16 MXU inputs with f32 accumulation -> loosened tolerances vs f32 ref.
    rtol, atol = 5e-2, 5e-2

    # Small test: single grid step.
    x1 = jax.random.normal(kx1, (8, input_size), jnp.float32)
    out1 = jax.block_until_ready(mlp_forward(x1, *prepped))
    np.testing.assert_allclose(np.asarray(out1),
                               np.asarray(mlp_reference(x1, *params)),
                               rtol=rtol, atol=atol)

    # Larger test: exercises a multi-step batch grid (tm=32, 3 steps).
    x2 = jax.random.normal(kx2, (96, input_size), jnp.float32)
    out2 = jax.block_until_ready(mlp_forward(x2, *prepped, block_batch=32))
    np.testing.assert_allclose(np.asarray(out2),
                               np.asarray(mlp_reference(x2, *params)),
                               rtol=rtol, atol=atol)

    # Ragged batch: exercises batch padding to x8 + tail slice.
    x3 = jax.random.normal(kx3, (10, input_size), jnp.float32)
    out3 = jax.block_until_ready(mlp_forward(x3, *prepped))
    np.testing.assert_allclose(np.asarray(out3),
                               np.asarray(mlp_reference(x3, *params)),
                               rtol=rtol, atol=atol)

    print("KERNEL_OK")
</pallas_src>

<mosaic_0001>
module attributes {stable_mosaic.version = 11 : i64} {
  func.func @mlp_kernel(%arg0: i32, %arg1: memref<8x32xf32, #tpu.memory_space<vmem>>, %arg2: memref<32x128xbf16, #tpu.memory_space<vmem>>, %arg3: memref<1x128xf32, #tpu.memory_space<vmem>>, %arg4: memref<128x128xbf16, #tpu.memory_space<vmem>>, %arg5: memref<1x128xf32, #tpu.memory_space<vmem>>, %arg6: memref<128x4xbf16, #tpu.memory_space<vmem>>, %arg7: memref<1x4xf32, #tpu.memory_space<vmem>>, %arg8: memref<8x4xf32, #tpu.memory_space<vmem>>) attributes {dimension_semantics = [#tpu.dimension_semantics<parallel>], iteration_bounds = array<i64: 1>, scalar_prefetch = 0 : i64, scratch_operands = 0 : i64, tpu.core_type = #tpu.core_type<tc>, window_params = [{transform_indices = @transform_0, window_bounds = array<i64: 8, 32>}, {pipeline_mode = #tpu.pipeline_mode<synchronous>, transform_indices = @transform_1, window_bounds = array<i64: 32, 128>}, {pipeline_mode = #tpu.pipeline_mode<synchronous>, transform_indices = @transform_2, window_bounds = array<i64: 1, 128>}, {pipeline_mode = #tpu.pipeline_mode<synchronous>, transform_indices = @transform_3, window_bounds = array<i64: 128, 128>}, {pipeline_mode = #tpu.pipeline_mode<synchronous>, transform_indices = @transform_4, window_bounds = array<i64: 1, 128>}, {pipeline_mode = #tpu.pipeline_mode<synchronous>, transform_indices = @transform_5, window_bounds = array<i64: 128, 4>}, {pipeline_mode = #tpu.pipeline_mode<synchronous>, transform_indices = @transform_6, window_bounds = array<i64: 1, 4>}, {transform_indices = @transform_7, window_bounds = array<i64: 8, 4>}]} {
    %c0 = arith.constant 0 : index
    %c0_0 = arith.constant 0 : index
    %0 = vector.load %arg1[%c0, %c0_0] : memref<8x32xf32, #tpu.memory_space<vmem>>, vector<8x32xf32>
    %1 = arith.truncf %0 : vector<8x32xf32> to vector<8x32xbf16>
    %c0_1 = arith.constant 0 : index
    %c0_2 = arith.constant 0 : index
    %2 = vector.load %arg2[%c0_1, %c0_2] : memref<32x128xbf16, #tpu.memory_space<vmem>>, vector<32x128xbf16>
    %cst = arith.constant dense<0.000000e+00> : vector<8x128xf32>
    %3 = tpu.matmul %1, %2, %cst {dimension_numbers = #tpu.dot_dimension_numbers<[1], [0], [0], [1], [0, 0, 1, 1], [], []>} : vector<8x32xbf16>, vector<32x128xbf16>, vector<8x128xf32> -> vector<8x128xf32>
    %c0_3 = arith.constant 0 : index
    %c0_4 = arith.constant 0 : index
    %4 = vector.load %arg3[%c0_3, %c0_4] : memref<1x128xf32, #tpu.memory_space<vmem>>, vector<1x128xf32>
    %5 = vector.broadcast %4 : vector<1x128xf32> to vector<8x128xf32>
    %6 = arith.addf %3, %5 : vector<8x128xf32>
    %cst_5 = arith.constant 0.000000e+00 : f32
    %7 = vector.broadcast %cst_5 : f32 to vector<8x128xf32>
    %8 = arith.maximumf %6, %7 : vector<8x128xf32>
    %9 = arith.truncf %8 : vector<8x128xf32> to vector<8x128xbf16>
    %c0_6 = arith.constant 0 : index
    %c0_7 = arith.constant 0 : index
    %10 = vector.load %arg4[%c0_6, %c0_7] : memref<128x128xbf16, #tpu.memory_space<vmem>>, vector<128x128xbf16>
    %cst_8 = arith.constant dense<0.000000e+00> : vector<8x128xf32>
    %11 = tpu.matmul %9, %10, %cst_8 {dimension_numbers = #tpu.dot_dimension_numbers<[1], [0], [0], [1], [0, 0, 1, 1], [], []>} : vector<8x128xbf16>, vector<128x128xbf16>, vector<8x128xf32> -> vector<8x128xf32>
    %c0_9 = arith.constant 0 : index
    %c0_10 = arith.constant 0 : index
    %12 = vector.load %arg5[%c0_9, %c0_10] : memref<1x128xf32, #tpu.memory_space<vmem>>, vector<1x128xf32>
    %13 = vector.broadcast %12 : vector<1x128xf32> to vector<8x128xf32>
    %14 = arith.addf %11, %13 : vector<8x128xf32>
    %cst_11 = arith.constant 0.000000e+00 : f32
    %15 = vector.broadcast %cst_11 : f32 to vector<8x128xf32>
    %16 = arith.maximumf %14, %15 : vector<8x128xf32>
    %17 = arith.truncf %16 : vector<8x128xf32> to vector<8x128xbf16>
    %c0_12 = arith.constant 0 : index
    %c0_13 = arith.constant 0 : index
    %18 = vector.load %arg6[%c0_12, %c0_13] : memref<128x4xbf16, #tpu.memory_space<vmem>>, vector<128x4xbf16>
    %cst_14 = arith.constant dense<0.000000e+00> : vector<8x4xf32>
    %19 = tpu.matmul %17, %18, %cst_14 {dimension_numbers = #tpu.dot_dimension_numbers<[1], [0], [0], [1], [0, 0, 1, 1], [], []>} : vector<8x128xbf16>, vector<128x4xbf16>, vector<8x4xf32> -> vector<8x4xf32>
    %c0_15 = arith.constant 0 : index
    %c0_16 = arith.constant 0 : index
    %20 = vector.load %arg7[%c0_15, %c0_16] : memref<1x4xf32, #tpu.memory_space<vmem>>, vector<1x4xf32>
    %21 = vector.broadcast %20 : vector<1x4xf32> to vector<8x4xf32>
    %22 = arith.addf %19, %21 : vector<8x4xf32>
    %c0_17 = arith.constant 0 : index
    %c0_18 = arith.constant 0 : index
    %23 = vector.load %arg8[%c0_17, %c0_18] : memref<8x4xf32, #tpu.memory_space<vmem>>, vector<8x4xf32>
    tpu.vector_store %arg8[%c0_17, %c0_18], %22 {strides = array<i32>} : memref<8x4xf32, #tpu.memory_space<vmem>>, vector<8x4xf32>,
    return
  }
  func.func @transform_0(%arg0: i32) -> (i32, i32) {
    %c0_i32 = arith.constant 0 : i32
    %c0_i32_0 = arith.constant 0 : i32
    return %arg0, %c0_i32 : i32, i32
  }
  func.func @transform_1(%arg0: i32) -> (i32, i32) {
    %c0_i32 = arith.constant 0 : i32
    %c0_i32_0 = arith.constant 0 : i32
    %c0_i32_1 = arith.constant 0 : i32
    return %c0_i32, %c0_i32_0 : i32, i32
  }
  func.func @transform_2(%arg0: i32) -> (i32, i32) {
    %c0_i32 = arith.constant 0 : i32
    %c0_i32_0 = arith.constant 0 : i32
    %c0_i32_1 = arith.constant 0 : i32
    return %c0_i32, %c0_i32_0 : i32, i32
  }
  func.func @transform_3(%arg0: i32) -> (i32, i32) {
    %c0_i32 = arith.constant 0 : i32
    %c0_i32_0 = arith.constant 0 : i32
    %c0_i32_1 = arith.constant 0 : i32
    return %c0_i32, %c0_i32_0 : i32, i32
  }
  func.func @transform_4(%arg0: i32) -> (i32, i32) {
    %c0_i32 = arith.constant 0 : i32
    %c0_i32_0 = arith.constant 0 : i32
    %c0_i32_1 = arith.constant 0 : i32
    return %c0_i32, %c0_i32_0 : i32, i32
  }
  func.func @transform_5(%arg0: i32) -> (i32, i32) {
    %c0_i32 = arith.constant 0 : i32
    %c0_i32_0 = arith.constant 0 : i32
    %c0_i32_1 = arith.constant 0 : i32
    return %c0_i32, %c0_i32_0 : i32, i32
  }
  func.func @transform_6(%arg0: i32) -> (i32, i32) {
    %c0_i32 = arith.constant 0 : i32
    %c0_i32_0 = arith.constant 0 : i32
    %c0_i32_1 = arith.constant 0 : i32
    return %c0_i32, %c0_i32_0 : i32, i32
  }
  func.func @transform_7(%arg0: i32) -> (i32, i32) {
    %c0_i32 = arith.constant 0 : i32
    %c0_i32_0 = arith.constant 0 : i32
    return %arg0, %c0_i32 : i32, i32
  }
}

</mosaic_0001>

<llo_original>
// kernel: mlp_forward.1
$region0: #{mlp_forward.1}
  #allocation0 [shape = 'u32[]', space=smem, size = 0x4, offset = 0x4, fixed_abs, tag = 'smem constant byte address 0x4 - core index']
  #allocation1 [shape = 'u32[144,128]{1,0:T(1,128)}', space=vmem, size = 0x12000, scoped, tag = 'internal scratch']
  %s0 = inlined_call_operand.hbm [shape: f32[8,32], index: 0, kind: input, shape index: {}]
  %s1 = inlined_call_operand.hbm [shape: bf16[32,128], index: 1, kind: input, shape index: {}]
  %s2 = inlined_call_operand.vmem [shape: f32[1,128], index: 2, kind: input, shape index: {}]
  %s3 = inlined_call_operand.vmem [shape: bf16[128,128], index: 3, kind: input, shape index: {}]
  %s4 = inlined_call_operand.vmem [shape: f32[1,128], index: 4, kind: input, shape index: {}]
  %s5 = inlined_call_operand.vmem [shape: bf16[128,4], index: 5, kind: input, shape index: {}]
  %s6 = inlined_call_operand.vmem [shape: f32[1,4], index: 6, kind: input, shape index: {}]
  %s7 = inlined_call_operand.vmem [shape: f32[8,4], index: 7, kind: output, shape index: {}]
  %s8 = sld [smem:[#allocation0]]
  $region46: #{mlp_forward.1} parent=0
    _
  %s10 = ssub.s32 1, %s8
  %s11 = scalar_select 0, %s10, %s8
  $region1: #{mlp_forward.1} parent=0
    #allocation2 [shape = 'u8[4096]{0}', space=vmem, size = 0x1000, scoped, tag = 'input window, operand 0, single buffered']
    #allocation3 [shape = 's32[1]{0}', space=sflag, size = 0x4, scoped, tag = 'scoped memory for mlp_forward.1']
    #allocation4 [shape = 'u8[8192]{0}', space=vmem, size = 0x2000, scoped, tag = 'input window, operand 1, single buffered']
    #allocation5 [shape = 's32[1]{0}', space=sflag, size = 0x4, scoped, tag = 'scoped memory for mlp_forward.1']
    %12 = vsyncpa [#allocation3], 0
    %13 = vsyncpa [#allocation5], 0
    // Predicated region
    $region2: #{mlp_forward.1} parent=1 // pred_check
      _
    $region3: #{mlp_forward.1} parent=1 // pred_check_branch
      %15 = sbr.rel (0) target = $region5
    $region4: #{mlp_forward.1} parent=1 // pred_region
      %s17 = ssub.s32 128, 128
      %18 = vsyncadd [#allocation3], %s17
      %s20 = sshll.u32 [#allocation2], 4
      %s21 = int_to_ptr.vmem [resolvable:$true] %s20
      %23 = dma.hbm_to_vmem [thread:$0]  %s0, 128, %s21, [#allocation3]
    $region5: #{mlp_forward.1} parent=1 // pred_fallthru
      _
    // Predicated region
    $region6: #{mlp_forward.1} parent=1 // pred_check
      _
    $region7: #{mlp_forward.1} parent=1 // pred_check_branch
      %25 = sbr.rel (0) target = $region9
    $region8: #{mlp_forward.1} parent=1 // pred_region
      %s27 = ssub.s32 256, 256
      %28 = vsyncadd [#allocation5], %s27
      %s29 = sshll.u32 [#allocation4], 4
      %s30 = int_to_ptr.vmem [resolvable:$true] %s29
      %35 = dma.hbm_to_vmem [thread:$0]  %s1, 256, %s30, [#allocation5], 64, 64, 4
    $region9: #{mlp_forward.1} parent=1 // pred_fallthru
      _
    // Predicated region
    $region10: #{mlp_forward.1} parent=1 // pred_check
      _
    $region11: #{mlp_forward.1} parent=1 // pred_check_branch
      %37 = sbr.rel (0) target = $region13
    $region12: #{mlp_forward.1} parent=1 // pred_region
      _
    $region13: #{mlp_forward.1} parent=1 // pred_fallthru
      _
    // Predicated region
    $region14: #{mlp_forward.1} parent=1 // pred_check
      _
    $region15: #{mlp_forward.1} parent=1 // pred_check_branch
      %39 = sbr.rel (0) target = $region17
    $region16: #{mlp_forward.1} parent=1 // pred_region
      _
    $region17: #{mlp_forward.1} parent=1 // pred_fallthru
      _
    // Predicated region
    $region18: #{mlp_forward.1} parent=1 // pred_check
      _
    $region19: #{mlp_forward.1} parent=1 // pred_check_branch
      %41 = sbr.rel (0) target = $region21
    $region20: #{mlp_forward.1} parent=1 // pred_region
      _
    $region21: #{mlp_forward.1} parent=1 // pred_fallthru
      _
    // Predicated region
    $region22: #{mlp_forward.1} parent=1 // pred_check
      _
    $region23: #{mlp_forward.1} parent=1 // pred_check_branch
      %43 = sbr.rel (0) target = $region25
    $region24: #{mlp_forward.1} parent=1 // pred_region
      _
    $region25: #{mlp_forward.1} parent=1 // pred_fallthru
      _
    // Predicated region
    $region26: #{mlp_forward.1} parent=1 // pred_check
      _
    $region27: #{mlp_forward.1} parent=1 // pred_check_branch
      %45 = sbr.rel (0) target = $region29
    $region28: #{mlp_forward.1} parent=1 // pred_region
      _
    $region29: #{mlp_forward.1} parent=1 // pred_fallthru
      _
    // Predicated region
    $region30: #{mlp_forward.1} parent=1 // pred_check
      _
    $region31: #{mlp_forward.1} parent=1 // pred_check_branch
      %47 = sbr.rel (0) target = $region33
    $region32: #{mlp_forward.1} parent=1 // pred_region
      %48 = dma.done [#allocation3], 128
    $region33: #{mlp_forward.1} parent=1 // pred_fallthru
      _
    // Predicated region
    $region34: #{mlp_forward.1} parent=1 // pred_check
      _
    $region35: #{mlp_forward.1} parent=1 // pred_check_branch
      %50 = sbr.rel (0) target = $region37
    $region36: #{mlp_forward.1} parent=1 // pred_region
      %51 = dma.done [#allocation5], 256
    $region37: #{mlp_forward.1} parent=1 // pred_fallthru
      _
    %v53 = vld [vmem:[#allocation2] sm:$0xff]
    %v54 = vpack.c.bf16 %v53, %v53
    %v55 = vld [vmem:[#allocation4] sm:$0xf]
    %v56 = vld [vmem:[#allocation4 + $0x4] sm:$0xf]
    %v57 = vld [vmem:[#allocation4 + $0x8] sm:$0xf]
    %v58 = vld [vmem:[#allocation4 + $0xc] sm:$0xf]
    %v59 = vld [vmem:[%s2] sm:$0x1]
    %v61 = vlaneseq
    %v62 = vshrl.u32 %v61, 7
    %v63 = vsub.s32 0, %v62
    %v64 = vrot.slane %v59, %v63
    %v70 = vunpack.c.l.b16 %v55
    %v71 = vunpack.c.l.b16 %v56
    %v72 = vunpack.c.l.b16 %v57
    %v73 = vunpack.c.l.b16 %v58
    %v74 = vpack.c.b16 %v71, %v70
    %v75 = vpack.c.b16 %v73, %v72
    %vm78 = vcmask 261120
    %v80 = vsel %vm78, %v54, 0
    %82 = vmatprep.subr.bf16.mxu0 0
    %83 = vmatpush1.bf16.msra.mxu0 0
    %84 = vmatprep.subr.bf16.mxu0 0
    %85 = vmatpush1.bf16.msra.mxu0 0
    %86 = vmatprep.subr.bf16.mxu0 0
    %87 = vmatpush1.bf16.msra.mxu0 0
    %88 = vmatprep.subr.bf16.mxu0 0
    %89 = vmatpush1.bf16.msra.mxu0 0
    %90 = vmatprep.subr.bf16.mxu0 0
    %91 = vmatpush1.bf16.msra.mxu0 0
    %92 = vmatprep.subr.bf16.mxu0 0
    %93 = vmatpush1.bf16.msra.mxu0 0
    %94 = vmatprep.subr.bf16.mxu0 0
    %95 = vmatpush1.bf16.msra.mxu0 %v75
    %96 = vmatprep.subr.bf16.mxu0 0
    %97 = vmatpush1.bf16.msra.mxu0 %v74
    %98 = vmatprep.subr.bf16.mxu0 0
    %99 = vmatpush2.bf16.msra.mxu0 0
    %100 = vmatprep.subr.bf16.mxu0 0
    %101 = vmatpush2.bf16.msra.mxu0 0
    %102 = vmatprep.subr.bf16.mxu0 0
    %103 = vmatpush2.bf16.msra.mxu0 0
    %104 = vmatprep.subr.bf16.mxu0 0
    %105 = vmatpush2.bf16.msra.mxu0 0
    %106 = vmatprep.subr.bf16.mxu0 0
    %107 = vmatpush2.bf16.msra.mxu0 0
    %108 = vmatprep.subr.bf16.mxu0 0
    %109 = vmatpush2.bf16.msra.mxu0 0
    %110 = vmatprep.subr.bf16.mxu0 0
    %111 = vmatpush2.bf16.msra.mxu0 0
    %112 = vmatprep.subr.bf16.mxu0 0
    %113 = vmatpush2.bf16.msra.mxu0 0
    %114 = vmatprep.mubr.bf16.mxu0 0
    %115 = vmatmul.mubr.bf16.gmra.mxu0 %v80
    %v116 = vpop.f32.mrf.mxu0
    %v117 = vadd.f32 %v64, %v116
    %v118 = vpop.f32.mrf.mxu0
    %v119 = vpop.f32.mrf.mxu0
    %v120 = vpop.f32.mrf.mxu0
    %121 = vdwg.mxu0
    %v122 = vmax.f32 %v117, 0.0
    %v123 = vpack.c.bf16 %v122, %v122
    %v124 = vld [vmem:[%s3] sm:$0xf]
    %v125 = vld [vmem:[%s3 + $0x4] sm:$0xf]
    %v126 = vld [vmem:[%s3 + $0x8] sm:$0xf]
    %v127 = vld [vmem:[%s3 + $0xc] sm:$0xf]
    %v128 = vld [vmem:[%s3 + $0x10] sm:$0xf]
    %v129 = vld [vmem:[%s3 + $0x14] sm:$0xf]
    %v130 = vld [vmem:[%s3 + $0x18] sm:$0xf]
    %v131 = vld [vmem:[%s3 + $0x1c] sm:$0xf]
    %v132 = vld [vmem:[%s3 + $0x20] sm:$0xf]
    %v133 = vld [vmem:[%s3 + $0x24] sm:$0xf]
    %v134 = vld [vmem:[%s3 + $0x28] sm:$0xf]
    %v135 = vld [vmem:[%s3 + $0x2c] sm:$0xf]
    %v136 = vld [vmem:[%s3 + $0x30] sm:$0xf]
    %v137 = vld [vmem:[%s3 + $0x34] sm:$0xf]
    %v138 = vld [vmem:[%s3 + $0x38] sm:$0xf]
    %v139 = vld [vmem:[%s3 + $0x3c] sm:$0xf]
    %v140 = vld [vmem:[%s4] sm:$0x1]
    %v142 = vlaneseq
    %v143 = vshrl.u32 %v142, 7
    %v144 = vsub.s32 0, %v143
    %v145 = vrot.slane %v140, %v144
    %v163 = vunpack.c.l.b16 %v124
    %v164 = vunpack.c.l.b16 %v125
    %v165 = vunpack.c.l.b16 %v126
    %v166 = vunpack.c.l.b16 %v127
    %v167 = vunpack.c.l.b16 %v128
    %v168 = vunpack.c.l.b16 %v129
    %v169 = vunpack.c.l.b16 %v130
    %v170 = vunpack.c.l.b16 %v131
    %v171 = vunpack.c.l.b16 %v132
    %v172 = vunpack.c.l.b16 %v133
    %v173 = vunpack.c.l.b16 %v134
    %v174 = vunpack.c.l.b16 %v135
    %v175 = vunpack.c.l.b16 %v136
    %v176 = vunpack.c.l.b16 %v137
    %v177 = vunpack.c.l.b16 %v138
    %v178 = vunpack.c.l.b16 %v139
    %v179 = vpack.c.b16 %v164, %v163
    %v180 = vpack.c.b16 %v166, %v165
    %v181 = vpack.c.b16 %v168, %v167
    %v182 = vpack.c.b16 %v170, %v169
    %v183 = vpack.c.b16 %v172, %v171
    %v184 = vpack.c.b16 %v174, %v173
    %v185 = vpack.c.b16 %v176, %v175
    %v186 = vpack.c.b16 %v178, %v177
    %195 = vmatprep.subr.bf16.mxu0 0
    %196 = vmatpush1.bf16.msra.mxu0 %v186
    %197 = vmatprep.subr.bf16.mxu0 0
    %198 = vmatpush1.bf16.msra.mxu0 %v185
    %199 = vmatprep.subr.bf16.mxu0 0
    %200 = vmatpush1.bf16.msra.mxu0 %v184
    %201 = vmatprep.subr.bf16.mxu0 0
    %202 = vmatpush1.bf16.msra.mxu0 %v183
    %203 = vmatprep.subr.bf16.mxu0 0
    %204 = vmatpush1.bf16.msra.mxu0 %v182
    %205 = vmatprep.subr.bf16.mxu0 0
    %206 = vmatpush1.bf16.msra.mxu0 %v181
    %207 = vmatprep.subr.bf16.mxu0 0
    %208 = vmatpush1.bf16.msra.mxu0 %v180
    %209 = vmatprep.subr.bf16.mxu0 0
    %210 = vmatpush1.bf16.msra.mxu0 %v179
    %211 = vmatprep.subr.bf16.mxu0 0
    %212 = vmatpush2.bf16.msra.mxu0 0
    %213 = vmatprep.subr.bf16.mxu0 0
    %214 = vmatpush2.bf16.msra.mxu0 0
    %215 = vmatprep.subr.bf16.mxu0 0
    %216 = vmatpush2.bf16.msra.mxu0 0
    %217 = vmatprep.subr.bf16.mxu0 0
    %218 = vmatpush2.bf16.msra.mxu0 0
    %219 = vmatprep.subr.bf16.mxu0 0
    %220 = vmatpush2.bf16.msra.mxu0 0
    %221 = vmatprep.subr.bf16.mxu0 0
    %222 = vmatpush2.bf16.msra.mxu0 0
    %223 = vmatprep.subr.bf16.mxu0 0
    %224 = vmatpush2.bf16.msra.mxu0 0
    %225 = vmatprep.subr.bf16.mxu0 0
    %226 = vmatpush2.bf16.msra.mxu0 0
    %227 = vmatprep.mubr.bf16.mxu0 0
    %228 = vmatmul.mubr.bf16.gmra.mxu0 %v123
    %v229 = vpop.f32.mrf.mxu0
    %v230 = vadd.f32 %v145, %v229
    %v231 = vpop.f32.mrf.mxu0
    %v232 = vpop.f32.mrf.mxu0
    %v233 = vpop.f32.mrf.mxu0
    %234 = vdwg.mxu0
    %v235 = vmax.f32 %v230, 0.0
    %v236 = vpack.c.bf16 %v235, %v235
    %v237 = vld [vmem:[%s5] sm:$0xf]
    %v238 = vld [vmem:[%s5 + $0x4] sm:$0xf]
    %v239 = vld [vmem:[%s5 + $0x8] sm:$0xf]
    %v240 = vld [vmem:[%s5 + $0xc] sm:$0xf]
    %v241 = vld [vmem:[%s5 + $0x10] sm:$0xf]
    %v242 = vld [vmem:[%s5 + $0x14] sm:$0xf]
    %v243 = vld [vmem:[%s5 + $0x18] sm:$0xf]
    %v244 = vld [vmem:[%s5 + $0x1c] sm:$0xf]
    %v245 = vld [vmem:[%s5 + $0x20] sm:$0xf]
    %v246 = vld [vmem:[%s5 + $0x24] sm:$0xf]
    %v247 = vld [vmem:[%s5 + $0x28] sm:$0xf]
    %v248 = vld [vmem:[%s5 + $0x2c] sm:$0xf]
    %v249 = vld [vmem:[%s5 + $0x30] sm:$0xf]
    %v250 = vld [vmem:[%s5 + $0x34] sm:$0xf]
    %v251 = vld [vmem:[%s5 + $0x38] sm:$0xf]
    %v252 = vld [vmem:[%s5 + $0x3c] sm:$0xf]
    %v253 = vld [vmem:[%s6] sm:$0x1]
    %v255 = vlaneseq
    %v256 = vshrl.u32 %v255, 7
    %v257 = vsub.s32 0, %v256
    %v258 = vrot.slane %v253, %v257
    %v276 = vunpack.c.l.b16 %v237
    %v277 = vunpack.c.l.b16 %v238
    %v278 = vunpack.c.l.b16 %v239
    %v279 = vunpack.c.l.b16 %v240
    %v280 = vunpack.c.l.b16 %v241
    %v281 = vunpack.c.l.b16 %v242
    %v282 = vunpack.c.l.b16 %v243
    %v283 = vunpack.c.l.b16 %v244
    %v284 = vunpack.c.l.b16 %v245
    %v285 = vunpack.c.l.b16 %v246
    %v286 = vunpack.c.l.b16 %v247
    %v287 = vunpack.c.l.b16 %v248
    %v288 = vunpack.c.l.b16 %v249
    %v289 = vunpack.c.l.b16 %v250
    %v290 = vunpack.c.l.b16 %v251
    %v291 = vunpack.c.l.b16 %v252
    %v292 = vpack.c.b16 %v277, %v276
    %v293 = vpack.c.b16 %v279, %v278
    %v294 = vpack.c.b16 %v281, %v280
    %v295 = vpack.c.b16 %v283, %v282
    %v296 = vpack.c.b16 %v285, %v284
    %v297 = vpack.c.b16 %v287, %v286
    %v298 = vpack.c.b16 %v289, %v288
    %v299 = vpack.c.b16 %v291, %v290
    %308 = vmatprep.subr.bf16.mxu0 0
    %309 = vmatpush1.bf16.msra.mxu0 %v299
    %310 = vmatprep.subr.bf16.mxu0 0
    %311 = vmatpush1.bf16.msra.mxu0 %v298
    %312 = vmatprep.subr.bf16.mxu0 0
    %313 = vmatpush1.bf16.msra.mxu0 %v297
    %314 = vmatprep.subr.bf16.mxu0 0
    %315 = vmatpush1.bf16.msra.mxu0 %v296
    %316 = vmatprep.subr.bf16.mxu0 0
    %317 = vmatpush1.bf16.msra.mxu0 %v295
    %318 = vmatprep.subr.bf16.mxu0 0
    %319 = vmatpush1.bf16.msra.mxu0 %v294
    %320 = vmatprep.subr.bf16.mxu0 0
    %321 = vmatpush1.bf16.msra.mxu0 %v293
    %322 = vmatprep.subr.bf16.mxu0 0
    %323 = vmatpush1.bf16.msra.mxu0 %v292
    %324 = vmatprep.subr.bf16.mxu0 0
    %325 = vmatpush2.bf16.msra.mxu0 0
    %326 = vmatprep.subr.bf16.mxu0 0
    %327 = vmatpush2.bf16.msra.mxu0 0
    %328 = vmatprep.subr.bf16.mxu0 0
    %329 = vmatpush2.bf16.msra.mxu0 0
    %330 = vmatprep.subr.bf16.mxu0 0
    %331 = vmatpush2.bf16.msra.mxu0 0
    %332 = vmatprep.subr.bf16.mxu0 0
    %333 = vmatpush2.bf16.msra.mxu0 0
    %334 = vmatprep.subr.bf16.mxu0 0
    %335 = vmatpush2.bf16.msra.mxu0 0
    %336 = vmatprep.subr.bf16.mxu0 0
    %337 = vmatpush2.bf16.msra.mxu0 0
    %338 = vmatprep.subr.bf16.mxu0 0
    %339 = vmatpush2.bf16.msra.mxu0 0
    %340 = vmatprep.mubr.bf16.mxu0 0
    %341 = vmatmul.mubr.bf16.gmra.mxu0 %v236
    %v342 = vpop.f32.mrf.mxu0
    %v343 = vadd.f32 %v258, %v342
    %v344 = vpop.f32.mrf.mxu0
    %v345 = vpop.f32.mrf.mxu0
    %v346 = vpop.f32.mrf.mxu0
    %347 = vdwg.mxu0
    %vm348 = vcmask 31744
    %349 = vst.msk [vmem:[%s7] sm:$0xff] %vm348, %v343
    // Predicated region
    $region38: #{mlp_forward.1} parent=1 // pred_check
      _
    $region39: #{mlp_forward.1} parent=1 // pred_check_branch
      %351 = sbr.rel (0) target = $region41
    $region40: #{mlp_forward.1} parent=1 // pred_region
      _
    $region41: #{mlp_forward.1} parent=1 // pred_fallthru
      _
    // Predicated region
    $region42: #{mlp_forward.1} parent=1 // pred_check
      _
    $region43: #{mlp_forward.1} parent=1 // pred_check_branch
      %353 = sbr.rel (0) target = $region45
    $region44: #{mlp_forward.1} parent=1 // pred_region
      _
    $region45: #{mlp_forward.1} parent=1 // pred_fallthru
      _
    %354 = vsyncpa [#allocation3], 1
    %355 = vsyncpa [#allocation5], 1

</llo_original>
